<compile_context>
chip_gen: v7x
topology: tpu7x:2x2x1
jax: 0.10.0
libtpu: 0.0.40
codegen_flags: <defaults>
</compile_context>

<pallas_src>
import functools

import jax
import jax.numpy as jnp
from jax.experimental import pallas as pl
from jax.experimental.pallas import tpu as pltpu


_LANES = 128


def _round_up(x, m):
    return ((x + m - 1) // m) * m


@functools.lru_cache(maxsize=None)
def _vmem_budget():
    """(scoped_vmem_limit_bytes, tile_working_set_budget_bytes) per generation."""
    try:
        cap = int(pltpu.get_tpu_info().vmem_capacity_bytes)
    except Exception:  # pragma: no cover - be conservative if the query fails
        cap = 64 * 1024 * 1024
    # 128 MiB parts (v5e/v6e) -> 48 MiB scoped; 64 MiB parts (v7x) -> ~38 MiB.
    limit = min(48 * 1024 * 1024, (cap * 3) // 5)
    return limit, limit // 2


def _pick_tile_n(n, c, itemsize, budget_bytes):
    """Largest lane-aligned row tile whose working set fits the VMEM budget."""
    # Per-row bytes: 2x double-buffered native-dtype pred block + ~5 live
    # (row, C) f32/int32 temporaries in-kernel + lane-dense target/output
    # blocks and the relayout intermediates.
    per_row = c * (2 * itemsize + 5 * 4) + 1536
    # Small-C blocks waste lanes and leave tiny per-step DMAs; allow taller
    # tiles there so the ~0.35us/step overhead is amortized.
    cap = 4096 if c <= 128 else (2048 if c <= 512 else 1024)
    t = (budget_bytes // per_row) // _LANES * _LANES
    t = max(_LANES, min(cap, t))
    t = min(t, _round_up(n, _LANES))  # do not tile past the data
    if n > 2 * _LANES:
        # Keep >= ~4 grid steps when there is enough work: two steps per
        # TensorCore on dual-TC parts (v7x) and input-DMA/compute overlap on
        # single-TC parts.
        t = min(t, max(_LANES, _round_up(-(-n // 4), _LANES)))
    return max(_LANES, t)


def _ce_kernel(pred_ref, tgt_ref, loss_ref):
    """Per-row CE: loss[r] = logsumexp(pred[r, :]) - pred[r, tgt[r]].

    pred_ref: (tile_n, C) native dtype (upcast to f32 in-register).
    tgt_ref : (1, K, 128) int32 class indices, lane-dense (K = tile_n // 128).
    loss_ref: (1, K, 128) float32 lane-dense output.
    """
    tn, c = pred_ref.shape
    k = tn // _LANES

    x = pred_ref[...]                                    # (TN, C) native dtype
    x3 = x.reshape(k, _LANES, c)                         # free sublane regroup

    # Numerically stable log-sum-exp over the class (lane) axis.  The max is
    # taken on the native dtype (exact: elements ARE that dtype) to halve that
    # pass for bf16; the exp argument is computed in f32.
    m = jnp.max(x3, axis=-1, keepdims=True).astype(jnp.float32)       # (K,128,1)
    xf = x3.astype(jnp.float32)
    sumexp = jnp.sum(jnp.exp(xf - m), axis=-1, keepdims=True)         # (K,128,1)
    lse = m + jnp.log(sumexp)                                         # (K,128,1)

    # Lane-dense targets (1,K,128) -> sublane-indexed column (K,128,1) via a
    # diagonal select + lane reduce (plain VPU/XLU ops, no narrow transpose).
    eye = (jax.lax.broadcasted_iota(jnp.int32, (_LANES, _LANES), 0) ==
           jax.lax.broadcasted_iota(jnp.int32, (_LANES, _LANES), 1))
    tgt_row = tgt_ref[0]                                              # (K,128)
    tgt_col = jnp.sum(jnp.where(eye, tgt_row[:, None, :], 0),
                      axis=-1, keepdims=True)                         # (K,128,1)

    # One-hot gather of the target logit in the NATIVE dtype.  Exactly one
    # nonzero per row, so summing in the native dtype and upcasting afterwards
    # is exact (f32 accumulation precision is preserved).
    col = jax.lax.broadcasted_iota(jnp.int32, (k, _LANES, c), 2)
    zero = jnp.zeros((), dtype=x3.dtype)
    tgt_logit = jnp.sum(jnp.where(col == tgt_col, x3, zero),
                        axis=-1, keepdims=True).astype(jnp.float32)   # (K,128,1)

    # Out-of-range targets (torch ignore_index=-100 style) and the -1-padded
    # ragged-tail rows -> loss 0.  Garbage logits in the ragged tail only ever
    # land on invalid rows, so they are fully masked here.
    valid = (tgt_col >= 0) & (tgt_col < c)
    loss_col = jnp.where(valid, lse - tgt_logit, 0.0)                 # (K,128,1)

    # Relayout the sublane column into a lane-dense (K, 128) slab so the
    # writeback is a dense store (batched over K, no Python loop / concat).
    loss_row = jnp.sum(jnp.where(eye, loss_col, 0.0), axis=-2)        # (K,128)
    loss_ref[...] = loss_row[None]                                    # (1,K,128)


def _cross_entropy_2d(pred, target, tile_n=None):
    """reduction='none' cross entropy for pred (N, C), integer target (N,)."""
    n, c = pred.shape
    itemsize = jnp.dtype(pred.dtype).itemsize
    vmem_limit, budget = _vmem_budget()
    if tile_n is None:
        tile_n = _pick_tile_n(n, c, itemsize, budget)
    assert tile_n % _LANES == 0
    k = tile_n // _LANES

    n_tiles = -(-n // tile_n)          # cdiv: ragged last block, NO pred copy
    n_pad = n_tiles * tile_n

    # Only the tiny target array is padded; padded rows get target -1 ->
    # invalid -> loss 0 (and are sliced off below).  Delivered lane-dense.
    tgt = target.astype(jnp.int32)
    if n_pad != n:
        tgt = jnp.pad(tgt, ((0, n_pad - n),), constant_values=-1)
    tgt3 = tgt.reshape(n_tiles, k, _LANES)

    loss = pl.pallas_call(
        _ce_kernel,
        out_shape=jax.ShapeDtypeStruct((n_tiles, k, _LANES), jnp.float32),
        grid_spec=pltpu.PrefetchScalarGridSpec(
            num_scalar_prefetch=0,
            grid=(n_tiles,),
            in_specs=[
                # pred stays in its native dtype; upcast happens in-kernel.
                # The last block may be ragged; invalid rows are masked via
                # the -1-padded targets.
                pl.BlockSpec((tile_n, c), lambda i: (i, 0)),
                # Lane-dense int32 targets: one small dense DMA per step.
                pl.BlockSpec((1, k, _LANES), lambda i: (i, 0, 0)),
            ],
            out_specs=pl.BlockSpec((1, k, _LANES), lambda i: (i, 0, 0)),
        ),
        compiler_params=pltpu.CompilerParams(
            dimension_semantics=("parallel",),
            vmem_limit_bytes=vmem_limit,
        ),
    )(pred, tgt3)

    return loss.reshape(n_pad)[:n]


def cross_entropy_loss(pred, target, weight=None, avg_factor=None, *, tile_n=None):
    """JAX/Pallas equivalent of CrossEntropyLoss.forward.

    Note: `weight` is a per-sample multiplier applied AFTER the per-element CE,
    exactly as in the module body (`loss = weight * loss`), not torch's
    per-class F.cross_entropy(weight=...).
    """
    pred = jnp.asarray(pred)
    target = jnp.asarray(target)

    if pred.ndim == 2:
        loss = _cross_entropy_2d(pred, target, tile_n=tile_n)
    else:
        # torch layout (N, C, d1, ..., dk): move the class axis last, flatten.
        perm = (0,) + tuple(range(2, pred.ndim)) + (1,)
        flat = jnp.transpose(pred, perm).reshape(-1, pred.shape[1])
        loss = _cross_entropy_2d(flat, target.reshape(-1), tile_n=tile_n)
        loss = loss.reshape(target.shape)

    if weight is not None:
        loss = weight * loss
    if avg_factor is not None:
        avg_factor = avg_factor + 1e-06
        loss = loss.sum() / avg_factor
    return loss


if __name__ == "__main__":
    key = jax.random.PRNGKey(0)
    k_pred, k_tgt, k_w, k_pred2, k_tgt2 = jax.random.split(key, 5)

    # ---- main check: batch=8, num_classes=32, float32 ----------------------
    N, C = 8, 32
    pred = jax.random.normal(k_pred, (N, C), dtype=jnp.float32)
    target = jax.random.randint(k_tgt, (N,), 0, C, dtype=jnp.int32)
    weight = jax.random.uniform(k_w, (N,), dtype=jnp.float32)

    loss_none = cross_entropy_loss(pred, target)            # reduction='none'
    jax.block_until_ready(loss_none)
    ref = -(jax.nn.log_softmax(pred, axis=-1)[jnp.arange(N), target])
    assert jnp.allclose(loss_none, ref, atol=1e-5, rtol=1e-5)

    # weighted + avg_factor path (wrapper glue only, same kernel)
    loss_avg = cross_entropy_loss(pred, target, weight=weight, avg_factor=4.0)
    jax.block_until_ready(loss_avg)
    ref_avg = (weight * ref).sum() / (4.0 + 1e-06)
    assert jnp.allclose(loss_avg, ref_avg, atol=1e-5, rtol=1e-5)

    # ignore_index-style behaviour: out-of-range target -> zero loss
    tgt_ign = target.at[0].set(-100)
    loss_ign = cross_entropy_loss(pred, tgt_ign)
    jax.block_until_ready(loss_ign)
    assert loss_ign[0] == 0.0
    assert jnp.allclose(loss_ign[1:], ref[1:], atol=1e-5, rtol=1e-5)

    # ---- ragged N (not a multiple of the tile) with bf16 pred --------------
    N2, C2 = 200, 64
    pred2 = jax.random.normal(k_pred2, (N2, C2), dtype=jnp.bfloat16)
    target2 = jax.random.randint(k_tgt2, (N2,), 0, C2, dtype=jnp.int32)
    loss2 = cross_entropy_loss(pred2, target2)
    jax.block_until_ready(loss2)
    ref2 = -(jax.nn.log_softmax(pred2.astype(jnp.float32), axis=-1)
             [jnp.arange(N2), target2])
    assert loss2.shape == (N2,)
    assert jnp.allclose(loss2, ref2, atol=2e-5, rtol=2e-5)

    print("KERNEL_OK")
</pallas_src>

<mosaic_0001>
module attributes {stable_mosaic.version = 11 : i64} {
  func.func @_ce_kernel(%arg0: i32, %arg1: memref<128x32xf32, #tpu.memory_space<vmem>>, %arg2: memref<1x1x128xi32, #tpu.memory_space<vmem>>, %arg3: memref<1x1x128xf32, #tpu.memory_space<vmem>>) attributes {dimension_semantics = [#tpu.dimension_semantics<parallel>], iteration_bounds = array<i64: 1>, scalar_prefetch = 0 : i64, scratch_operands = 0 : i64, tpu.core_type = #tpu.core_type<tc>, window_params = [{transform_indices = @transform_0, window_bounds = array<i64: 128, 32>}, {transform_indices = @transform_1, window_bounds = array<i64: 1, 1, 128>}, {transform_indices = @transform_2, window_bounds = array<i64: 1, 1, 128>}]} {
    %c0 = arith.constant 0 : index
    %c0_0 = arith.constant 0 : index
    %0 = vector.load %arg1[%c0, %c0_0] : memref<128x32xf32, #tpu.memory_space<vmem>>, vector<128x32xf32>
    %1 = vector.shape_cast %0 : vector<128x32xf32> to vector<1x128x32xf32>
    %cst = arith.constant dense<0xFF800000> : vector<1x128xf32>
    %2 = vector.multi_reduction <maximumf>, %1, %cst [2] : vector<1x128x32xf32> to vector<1x128xf32>
    %3 = vector.shape_cast %2 : vector<1x128xf32> to vector<1x128x1xf32>
    %4 = vector.broadcast %3 : vector<1x128x1xf32> to vector<1x128x32xf32>
    %5 = arith.subf %1, %4 : vector<1x128x32xf32>
    %6 = math.exp %5 : vector<1x128x32xf32>
    %cst_1 = arith.constant dense<0.000000e+00> : vector<1x128xf32>
    %7 = vector.multi_reduction <add>, %6, %cst_1 [2] : vector<1x128x32xf32> to vector<1x128xf32>
    %8 = vector.shape_cast %7 : vector<1x128xf32> to vector<1x128x1xf32>
    %9 = math.log %8 : vector<1x128x1xf32>
    %10 = arith.addf %3, %9 : vector<1x128x1xf32>
    %11 = tpu.iota {dimensions = array<i32: 0>} : vector<128x128xi32>
    %12 = tpu.iota {dimensions = array<i32: 1>} : vector<128x128xi32>
    %13 = arith.cmpi eq, %11, %12 : vector<128x128xi32>
    %c0_2 = arith.constant 0 : index
    %c0_3 = arith.constant 0 : index
    %c0_4 = arith.constant 0 : index
    %14 = vector.load %arg2[%c0_2, %c0_3, %c0_4] : memref<1x1x128xi32, #tpu.memory_space<vmem>>, vector<1x1x128xi32>
    %15 = vector.shape_cast %14 : vector<1x1x128xi32> to vector<1x128xi32>
    %16 = vector.shape_cast %15 : vector<1x128xi32> to vector<1x1x128xi32>
    %c0_i32 = arith.constant 0 : i32
    %17 = vector.shape_cast %13 : vector<128x128xi1> to vector<1x128x128xi1>
    %18 = vector.shape_cast %16 : vector<1x1x128xi32> to vector<1x1x128xi32>
    %19 = vector.broadcast %18 : vector<1x1x128xi32> to vector<1x128x128xi32>
    %20 = vector.broadcast %c0_i32 : i32 to vector<1x128x128xi32>
    %21 = arith.select %17, %19, %20 : vector<1x128x128xi1>, vector<1x128x128xi32>
    %cst_5 = arith.constant dense<0> : vector<1x128xi32>
    %22 = vector.multi_reduction <add>, %21, %cst_5 [2] : vector<1x128x128xi32> to vector<1x128xi32>
    %23 = vector.shape_cast %22 : vector<1x128xi32> to vector<1x128x1xi32>
    %24 = tpu.iota {dimensions = array<i32: 2>} : vector<1x128x32xi32>
    %25 = vector.broadcast %23 : vector<1x128x1xi32> to vector<1x128x32xi32>
    %26 = arith.cmpi eq, %24, %25 : vector<1x128x32xi32>
    %cst_6 = arith.constant 0.000000e+00 : f32
    %27 = vector.broadcast %cst_6 : f32 to vector<1x128x32xf32>
    %28 = arith.select %26, %1, %27 : vector<1x128x32xi1>, vector<1x128x32xf32>
    %cst_7 = arith.constant dense<0.000000e+00> : vector<1x128xf32>
    %29 = vector.multi_reduction <add>, %28, %cst_7 [2] : vector<1x128x32xf32> to vector<1x128xf32>
    %30 = vector.shape_cast %29 : vector<1x128xf32> to vector<1x128x1xf32>
    %c0_i32_8 = arith.constant 0 : i32
    %31 = vector.broadcast %c0_i32_8 : i32 to vector<1x128x1xi32>
    %32 = arith.cmpi sge, %23, %31 : vector<1x128x1xi32>
    %c32_i32 = arith.constant 32 : i32
    %33 = vector.broadcast %c32_i32 : i32 to vector<1x128x1xi32>
    %34 = arith.cmpi slt, %23, %33 : vector<1x128x1xi32>
    %35 = arith.andi %32, %34 : vector<1x128x1xi1>
    %36 = arith.subf %10, %30 : vector<1x128x1xf32>
    %cst_9 = arith.constant 0.000000e+00 : f32
    %37 = vector.broadcast %cst_9 : f32 to vector<1x128x1xf32>
    %38 = arith.select %35, %36, %37 : vector<1x128x1xi1>, vector<1x128x1xf32>
    %cst_10 = arith.constant 0.000000e+00 : f32
    %39 = vector.shape_cast %13 : vector<128x128xi1> to vector<1x128x128xi1>
    %40 = vector.shape_cast %38 : vector<1x128x1xf32> to vector<1x128x1xf32>
    %41 = vector.broadcast %40 : vector<1x128x1xf32> to vector<1x128x128xf32>
    %42 = vector.broadcast %cst_10 : f32 to vector<1x128x128xf32>
    %43 = arith.select %39, %41, %42 : vector<1x128x128xi1>, vector<1x128x128xf32>
    %cst_11 = arith.constant dense<0.000000e+00> : vector<1x128xf32>
    %44 = vector.multi_reduction <add>, %43, %cst_11 [1] : vector<1x128x128xf32> to vector<1x128xf32>
    %45 = vector.shape_cast %44 : vector<1x128xf32> to vector<1x1x128xf32>
    %c0_12 = arith.constant 0 : index
    %c0_13 = arith.constant 0 : index
    %c0_14 = arith.constant 0 : index
    %46 = vector.load %arg3[%c0_12, %c0_13, %c0_14] : memref<1x1x128xf32, #tpu.memory_space<vmem>>, vector<1x1x128xf32>
    tpu.vector_store %arg3[%c0_12, %c0_13, %c0_14], %45 {strides = array<i32>} : memref<1x1x128xf32, #tpu.memory_space<vmem>>, vector<1x1x128xf32>,
    return
  }
  func.func @transform_0(%arg0: i32) -> (i32, i32) {
    %c0_i32 = arith.constant 0 : i32
    %c0_i32_0 = arith.constant 0 : i32
    return %arg0, %c0_i32 : i32, i32
  }
  func.func @transform_1(%arg0: i32) -> (i32, i32, i32) {
    %c0_i32 = arith.constant 0 : i32
    %c0_i32_0 = arith.constant 0 : i32
    %c0_i32_1 = arith.constant 0 : i32
    return %arg0, %c0_i32, %c0_i32_0 : i32, i32, i32
  }
  func.func @transform_2(%arg0: i32) -> (i32, i32, i32) {
    %c0_i32 = arith.constant 0 : i32
    %c0_i32_0 = arith.constant 0 : i32
    %c0_i32_1 = arith.constant 0 : i32
    return %arg0, %c0_i32, %c0_i32_0 : i32, i32, i32
  }
}

</mosaic_0001>

<llo_original>
// kernel: tpu_custom_call.1
$region0: #{tpu_custom_call.1}
  #allocation0 [shape = 'u32[]', space=smem, size = 0x4, offset = 0x4, fixed_abs, tag = 'smem constant byte address 0x4 - core index']
  #allocation1 [shape = 'u32[144,128]{1,0:T(1,128)}', space=vmem, size = 0x12000, scoped, tag = 'internal scratch']
  %s0 = inlined_call_operand.hbm [shape: f32[8,32], index: 0, kind: input, shape index: {}]
  %s1 = inlined_call_operand.vmem [shape: s32[1,1,128], index: 1, kind: input, shape index: {}]
  %s2 = inlined_call_operand.hbm [shape: f32[1,1,128], index: 2, kind: output, shape index: {}]
  %s3 = sld [smem:[#allocation0]]
  $region22: #{tpu_custom_call.1} parent=0
    _
  %s5 = ssub.s32 1, %s3
  %s6 = scalar_select 0, %s5, %s3
  $region1: #{tpu_custom_call.1} parent=0
    #allocation2 [shape = 'u8[65536]{0}', space=vmem, size = 0x10000, scoped, tag = 'input window, operand 0, single buffered']
    #allocation3 [shape = 's32[1]{0}', space=sflag, size = 0x4, scoped, tag = 'scoped memory for tpu_custom_call.1']
    #allocation4 [shape = 's32[1]{0}', space=sflag, size = 0x4, scoped, tag = 'scoped memory for tpu_custom_call.1']
    #allocation5 [shape = 'u8[512]{0}', space=vmem, size = 0x400, scoped, tag = 'output window, operand 0, single buffered']
    %7 = vsyncpa [#allocation3], 0
    %8 = vsyncpa [#allocation4], 0
    // Predicated region
    $region2: #{tpu_custom_call.1} parent=1 // pred_check
      _
    $region3: #{tpu_custom_call.1} parent=1 // pred_check_branch
      %10 = sbr.rel (0) target = $region5
    $region4: #{tpu_custom_call.1} parent=1 // pred_region
      %s12 = ssub.s32 2048, 128
      %13 = vsyncadd [#allocation3], %s12
      %s14 = sshll.u32 [#allocation2], 4
      %s15 = int_to_ptr.vmem [resolvable:$true] %s14
      %20 = dma.hbm_to_vmem [thread:$0]  %s0, 128, %s15, [#allocation3], 128, 128, 8
    $region5: #{tpu_custom_call.1} parent=1 // pred_fallthru
      _
    // Predicated region
    $region6: #{tpu_custom_call.1} parent=1 // pred_check
      _
    $region7: #{tpu_custom_call.1} parent=1 // pred_check_branch
      %22 = sbr.rel (0) target = $region9
    $region8: #{tpu_custom_call.1} parent=1 // pred_region
      _
    $region9: #{tpu_custom_call.1} parent=1 // pred_fallthru
      _
    // Predicated region
    $region10: #{tpu_custom_call.1} parent=1 // pred_check
      _
    $region11: #{tpu_custom_call.1} parent=1 // pred_check_branch
      %24 = sbr.rel (0) target = $region13
    $region12: #{tpu_custom_call.1} parent=1 // pred_region
      %25 = dma.done [#allocation3], 2048
    $region13: #{tpu_custom_call.1} parent=1 // pred_fallthru
      _
    %v26 = vld [vmem:[#allocation2] sm:$0xff]
    %v27 = vld [vmem:[#allocation2 + $0x8] sm:$0xff]
    %v28 = vld [vmem:[#allocation2 + $0x10] sm:$0xff]
    %v29 = vld [vmem:[#allocation2 + $0x18] sm:$0xff]
    %v30 = vld [vmem:[#allocation2 + $0x20] sm:$0xff]
    %v31 = vld [vmem:[#allocation2 + $0x28] sm:$0xff]
    %v32 = vld [vmem:[#allocation2 + $0x30] sm:$0xff]
    %v33 = vld [vmem:[#allocation2 + $0x38] sm:$0xff]
    %v34 = vld [vmem:[#allocation2 + $0x40] sm:$0xff]
    %v35 = vld [vmem:[#allocation2 + $0x48] sm:$0xff]
    %v36 = vld [vmem:[#allocation2 + $0x50] sm:$0xff]
    %v37 = vld [vmem:[#allocation2 + $0x58] sm:$0xff]
    %v38 = vld [vmem:[#allocation2 + $0x60] sm:$0xff]
    %v39 = vld [vmem:[#allocation2 + $0x68] sm:$0xff]
    %v40 = vld [vmem:[#allocation2 + $0x70] sm:$0xff]
    %v41 = vld [vmem:[#allocation2 + $0x78] sm:$0xff]
    %vm42 = vcmask 261120
    %v43 = vsel %vm42, %v26, -inf
    %44 = vmax.xlane.f32.xlu0 %v43
    %v45 = vpop.xlane.xlu0 %44
    %v46 = vsel %vm42, %v27, -inf
    %47 = vmax.xlane.f32.xlu0 %v46
    %v48 = vpop.xlane.xlu0 %47
    %v49 = vsel %vm42, %v28, -inf
    %50 = vmax.xlane.f32.xlu0 %v49
    %v51 = vpop.xlane.xlu0 %50
    %v52 = vsel %vm42, %v29, -inf
    %53 = vmax.xlane.f32.xlu0 %v52
    %v54 = vpop.xlane.xlu0 %53
    %v55 = vsel %vm42, %v30, -inf
    %56 = vmax.xlane.f32.xlu0 %v55
    %v57 = vpop.xlane.xlu0 %56
    %v58 = vsel %vm42, %v31, -inf
    %59 = vmax.xlane.f32.xlu0 %v58
    %v60 = vpop.xlane.xlu0 %59
    %v61 = vsel %vm42, %v32, -inf
    %62 = vmax.xlane.f32.xlu0 %v61
    %v63 = vpop.xlane.xlu0 %62
    %v64 = vsel %vm42, %v33, -inf
    %65 = vmax.xlane.f32.xlu0 %v64
    %v66 = vpop.xlane.xlu0 %65
    %v67 = vsel %vm42, %v34, -inf
    %68 = vmax.xlane.f32.xlu0 %v67
    %v69 = vpop.xlane.xlu0 %68
    %v70 = vsel %vm42, %v35, -inf
    %71 = vmax.xlane.f32.xlu0 %v70
    %v72 = vpop.xlane.xlu0 %71
    %v73 = vsel %vm42, %v36, -inf
    %74 = vmax.xlane.f32.xlu0 %v73
    %v75 = vpop.xlane.xlu0 %74
    %v76 = vsel %vm42, %v37, -inf
    %77 = vmax.xlane.f32.xlu0 %v76
    %v78 = vpop.xlane.xlu0 %77
    %v79 = vsel %vm42, %v38, -inf
    %80 = vmax.xlane.f32.xlu0 %v79
    %v81 = vpop.xlane.xlu0 %80
    %v82 = vsel %vm42, %v39, -inf
    %83 = vmax.xlane.f32.xlu0 %v82
    %v84 = vpop.xlane.xlu0 %83
    %v85 = vsel %vm42, %v40, -inf
    %86 = vmax.xlane.f32.xlu0 %v85
    %v87 = vpop.xlane.xlu0 %86
    %v88 = vsel %vm42, %v41, -inf
    %89 = vmax.xlane.f32.xlu0 %v88
    %v90 = vpop.xlane.xlu0 %89
    %v91 = vsub.f32 %v26, %v45
    %v92 = vsub.f32 %v27, %v48
    %v93 = vsub.f32 %v28, %v51
    %v94 = vsub.f32 %v29, %v54
    %v95 = vsub.f32 %v30, %v57
    %v96 = vsub.f32 %v31, %v60
    %v97 = vsub.f32 %v32, %v63
    %v98 = vsub.f32 %v33, %v66
    %v99 = vsub.f32 %v34, %v69
    %v100 = vsub.f32 %v35, %v72
    %v101 = vsub.f32 %v36, %v75
    %v102 = vsub.f32 %v37, %v78
    %v103 = vsub.f32 %v38, %v81
    %v104 = vsub.f32 %v39, %v84
    %v105 = vsub.f32 %v40, %v87
    %v106 = vsub.f32 %v41, %v90
    %v107 = vmul.f32 %v91, 1.442695
    %v108 = vpow.pop %v107
    %v109 = vmul.f32 %v92, 1.442695
    %v110 = vpow.pop %v109
    %v111 = vmul.f32 %v93, 1.442695
    %v112 = vpow.pop %v111
    %v113 = vmul.f32 %v94, 1.442695
    %v114 = vpow.pop %v113
    %v115 = vmul.f32 %v95, 1.442695
    %v116 = vpow.pop %v115
    %v117 = vmul.f32 %v96, 1.442695
    %v118 = vpow.pop %v117
    %v119 = vmul.f32 %v97, 1.442695
    %v120 = vpow.pop %v119
    %v121 = vmul.f32 %v98, 1.442695
    %v122 = vpow.pop %v121
    %v123 = vmul.f32 %v99, 1.442695
    %v124 = vpow.pop %v123
    %v125 = vmul.f32 %v100, 1.442695
    %v126 = vpow.pop %v125
    %v127 = vmul.f32 %v101, 1.442695
    %v128 = vpow.pop %v127
    %v129 = vmul.f32 %v102, 1.442695
    %v130 = vpow.pop %v129
    %v131 = vmul.f32 %v103, 1.442695
    %v132 = vpow.pop %v131
    %v133 = vmul.f32 %v104, 1.442695
    %v134 = vpow.pop %v133
    %v135 = vmul.f32 %v105, 1.442695
    %v136 = vpow.pop %v135
    %v137 = vmul.f32 %v106, 1.442695
    %v138 = vpow.pop %v137
    %v139 = vsel %vm42, %v108, 0.0
    %140 = vadd.xlane.f32.xlu0 %v139
    %v141 = vpop.xlane.xlu0 %140
    %v142 = vsel %vm42, %v110, 0.0
    %143 = vadd.xlane.f32.xlu0 %v142
    %v144 = vpop.xlane.xlu0 %143
    %v145 = vsel %vm42, %v112, 0.0
    %146 = vadd.xlane.f32.xlu0 %v145
    %v147 = vpop.xlane.xlu0 %146
    %v148 = vsel %vm42, %v114, 0.0
    %149 = vadd.xlane.f32.xlu0 %v148
    %v150 = vpop.xlane.xlu0 %149
    %v151 = vsel %vm42, %v116, 0.0
    %152 = vadd.xlane.f32.xlu0 %v151
    %v153 = vpop.xlane.xlu0 %152
    %v154 = vsel %vm42, %v118, 0.0
    %155 = vadd.xlane.f32.xlu0 %v154
    %v156 = vpop.xlane.xlu0 %155
    %v157 = vsel %vm42, %v120, 0.0
    %158 = vadd.xlane.f32.xlu0 %v157
    %v159 = vpop.xlane.xlu0 %158
    %v160 = vsel %vm42, %v122, 0.0
    %161 = vadd.xlane.f32.xlu0 %v160
    %v162 = vpop.xlane.xlu0 %161
    %v163 = vsel %vm42, %v124, 0.0
    %164 = vadd.xlane.f32.xlu0 %v163
    %v165 = vpop.xlane.xlu0 %164
    %v166 = vsel %vm42, %v126, 0.0
    %167 = vadd.xlane.f32.xlu0 %v166
    %v168 = vpop.xlane.xlu0 %167
    %v169 = vsel %vm42, %v128, 0.0
    %170 = vadd.xlane.f32.xlu0 %v169
    %v171 = vpop.xlane.xlu0 %170
    %v172 = vsel %vm42, %v130, 0.0
    %173 = vadd.xlane.f32.xlu0 %v172
    %v174 = vpop.xlane.xlu0 %173
    %v175 = vsel %vm42, %v132, 0.0
    %176 = vadd.xlane.f32.xlu0 %v175
    %v177 = vpop.xlane.xlu0 %176
    %v178 = vsel %vm42, %v134, 0.0
    %179 = vadd.xlane.f32.xlu0 %v178
    %v180 = vpop.xlane.xlu0 %179
    %v181 = vsel %vm42, %v136, 0.0
    %182 = vadd.xlane.f32.xlu0 %v181
    %v183 = vpop.xlane.xlu0 %182
    %v184 = vsel %vm42, %v138, 0.0
    %185 = vadd.xlane.f32.xlu0 %v184
    %v186 = vpop.xlane.xlu0 %185
    %v187 = vlog2.pop %v141
    %v188 = vmul.f32 %v187, 0.6931472
    %v189 = vlog2.pop %v144
    %v190 = vmul.f32 %v189, 0.6931472
    %v191 = vlog2.pop %v147
    %v192 = vmul.f32 %v191, 0.6931472
    %v193 = vlog2.pop %v150
    %v194 = vmul.f32 %v193, 0.6931472
    %v195 = vlog2.pop %v153
    %v196 = vmul.f32 %v195, 0.6931472
    %v197 = vlog2.pop %v156
    %v198 = vmul.f32 %v197, 0.6931472
    %v199 = vlog2.pop %v159
    %v200 = vmul.f32 %v199, 0.6931472
    %v201 = vlog2.pop %v162
    %v202 = vmul.f32 %v201, 0.6931472
    %v203 = vlog2.pop %v165
    %v204 = vmul.f32 %v203, 0.6931472
    %v205 = vlog2.pop %v168
    %v206 = vmul.f32 %v205, 0.6931472
    %v207 = vlog2.pop %v171
    %v208 = vmul.f32 %v207, 0.6931472
    %v209 = vlog2.pop %v174
    %v210 = vmul.f32 %v209, 0.6931472
    %v211 = vlog2.pop %v177
    %v212 = vmul.f32 %v211, 0.6931472
    %v213 = vlog2.pop %v180
    %v214 = vmul.f32 %v213, 0.6931472
    %v215 = vlog2.pop %v183
    %v216 = vmul.f32 %v215, 0.6931472
    %v217 = vlog2.pop %v186
    %v218 = vmul.f32 %v217, 0.6931472
    %v219 = vadd.f32 %v45, %v188
    %v220 = vadd.f32 %v48, %v190
    %v221 = vadd.f32 %v51, %v192
    %v222 = vadd.f32 %v54, %v194
    %v223 = vadd.f32 %v57, %v196
    %v224 = vadd.f32 %v60, %v198
    %v225 = vadd.f32 %v63, %v200
    %v226 = vadd.f32 %v66, %v202
    %v227 = vadd.f32 %v69, %v204
    %v228 = vadd.f32 %v72, %v206
    %v229 = vadd.f32 %v75, %v208
    %v230 = vadd.f32 %v78, %v210
    %v231 = vadd.f32 %v81, %v212
    %v232 = vadd.f32 %v84, %v214
    %v233 = vadd.f32 %v87, %v216
    %v234 = vadd.f32 %v90, %v218
    %v235 = vlaneseq
    %v236 = vshrl.u32 %v235, 7
    %v237 = vadd.s32 %v236, 8
    %v238 = vadd.s32 %v236, 16
    %v239 = vadd.s32 %v236, 24
    %v240 = vadd.s32 %v236, 32
    %v241 = vadd.s32 %v236, 40
    %v242 = vadd.s32 %v236, 48
    %v243 = vadd.s32 %v236, 56
    %v244 = vadd.s32 %v236, 64
    %v245 = vadd.s32 %v236, 72
    %v246 = vadd.s32 %v236, 80
    %v247 = vadd.s32 %v236, 88
    %v248 = vadd.s32 %v236, 96
    %v249 = vadd.s32 %v236, 104
    %v250 = vadd.s32 %v236, 112
    %v251 = vadd.s32 %v236, 120
    %v252 = vlaneseq
    %v253 = vand.u32 %v252, 127
    %vm254 = vcmp.eq.s32.totalorder %v236, %v253
    %vm255 = vcmp.eq.s32.totalorder %v237, %v253
    %vm256 = vcmp.eq.s32.totalorder %v238, %v253
    %vm257 = vcmp.eq.s32.totalorder %v239, %v253
    %vm258 = vcmp.eq.s32.totalorder %v240, %v253
    %vm259 = vcmp.eq.s32.totalorder %v241, %v253
    %vm260 = vcmp.eq.s32.totalorder %v242, %v253
    %vm261 = vcmp.eq.s32.totalorder %v243, %v253
    %vm262 = vcmp.eq.s32.totalorder %v244, %v253
    %vm263 = vcmp.eq.s32.totalorder %v245, %v253
    %vm264 = vcmp.eq.s32.totalorder %v246, %v253
    %vm265 = vcmp.eq.s32.totalorder %v247, %v253
    %vm266 = vcmp.eq.s32.totalorder %v248, %v253
    %vm267 = vcmp.eq.s32.totalorder %v249, %v253
    %vm268 = vcmp.eq.s32.totalorder %v250, %v253
    %vm269 = vcmp.eq.s32.totalorder %v251, %v253
    %v270 = vld [vmem:[%s1] sm:$0x1]
    %v271 = vlaneseq
    %v272 = vshrl.u32 %v271, 7
    %v273 = vsub.s32 0, %v272
    %v274 = vrot.slane %v270, %v273
    %v275 = vsel %vm254, %v274, 0
    %v276 = vsel %vm255, %v274, 0
    %v277 = vsel %vm256, %v274, 0
    %v278 = vsel %vm257, %v274, 0
    %v279 = vsel %vm258, %v274, 0
    %v280 = vsel %vm259, %v274, 0
    %v281 = vsel %vm260, %v274, 0
    %v282 = vsel %vm261, %v274, 0
    %v283 = vsel %vm262, %v274, 0
    %v284 = vsel %vm263, %v274, 0
    %v285 = vsel %vm264, %v274, 0
    %v286 = vsel %vm265, %v274, 0
    %v287 = vsel %vm266, %v274, 0
    %v288 = vsel %vm267, %v274, 0
    %v289 = vsel %vm268, %v274, 0
    %v290 = vsel %vm269, %v274, 0
    %v291 = vand.u32 %v275, 65535
    %v292 = vshrl.u32 %v275, 16
    %v293 = vcvt.s32.f32 %v291
    %v294 = vcvt.s32.f32 %v292
    %295 = vadd.xlane.f32.xlu0 %v293
    %v296 = vpop.xlane.xlu0 %295
    %297 = vadd.xlane.f32.xlu0 %v294
    %v298 = vpop.xlane.xlu0 %297
    %v299 = vcvt.f32.s32 %v296
    %v300 = vcvt.f32.s32 %v298
    %v301 = vshll.u32 %v300, 16
    %v302 = vadd.s32 %v301, %v299
    %v303 = vand.u32 %v276, 65535
    %v304 = vshrl.u32 %v276, 16
    %v305 = vcvt.s32.f32 %v303
    %v306 = vcvt.s32.f32 %v304
    %307 = vadd.xlane.f32.xlu0 %v305
    %v308 = vpop.xlane.xlu0 %307
    %309 = vadd.xlane.f32.xlu0 %v306
    %v310 = vpop.xlane.xlu0 %309
    %v311 = vcvt.f32.s32 %v308
    %v312 = vcvt.f32.s32 %v310
    %v313 = vshll.u32 %v312, 16
    %v314 = vadd.s32 %v313, %v311
    %v315 = vand.u32 %v277, 65535
    %v316 = vshrl.u32 %v277, 16
    %v317 = vcvt.s32.f32 %v315
    %v318 = vcvt.s32.f32 %v316
    %319 = vadd.xlane.f32.xlu0 %v317
    %v320 = vpop.xlane.xlu0 %319
    %321 = vadd.xlane.f32.xlu0 %v318
    %v322 = vpop.xlane.xlu0 %321
    %v323 = vcvt.f32.s32 %v320
    %v324 = vcvt.f32.s32 %v322
    %v325 = vshll.u32 %v324, 16
    %v326 = vadd.s32 %v325, %v323
    %v327 = vand.u32 %v278, 65535
    %v328 = vshrl.u32 %v278, 16
    %v329 = vcvt.s32.f32 %v327
    %v330 = vcvt.s32.f32 %v328
    %331 = vadd.xlane.f32.xlu0 %v329
    %v332 = vpop.xlane.xlu0 %331
    %333 = vadd.xlane.f32.xlu0 %v330
    %v334 = vpop.xlane.xlu0 %333
    %v335 = vcvt.f32.s32 %v332
    %v336 = vcvt.f32.s32 %v334
    %v337 = vshll.u32 %v336, 16
    %v338 = vadd.s32 %v337, %v335
    %v339 = vand.u32 %v279, 65535
    %v340 = vshrl.u32 %v279, 16
    %v341 = vcvt.s32.f32 %v339
    %v342 = vcvt.s32.f32 %v340
    %343 = vadd.xlane.f32.xlu0 %v341
    %v344 = vpop.xlane.xlu0 %343
    %345 = vadd.xlane.f32.xlu0 %v342
    %v346 = vpop.xlane.xlu0 %345
    %v347 = vcvt.f32.s32 %v344
    %v348 = vcvt.f32.s32 %v346
    %v349 = vshll.u32 %v348, 16
    %v350 = vadd.s32 %v349, %v347
    %v351 = vand.u32 %v280, 65535
    %v352 = vshrl.u32 %v280, 16
    %v353 = vcvt.s32.f32 %v351
    %v354 = vcvt.s32.f32 %v352
    %355 = vadd.xlane.f32.xlu0 %v353
    %v356 = vpop.xlane.xlu0 %355
    %357 = vadd.xlane.f32.xlu0 %v354
    %v358 = vpop.xlane.xlu0 %357
    %v359 = vcvt.f32.s32 %v356
    %v360 = vcvt.f32.s32 %v358
    %v361 = vshll.u32 %v360, 16
    %v362 = vadd.s32 %v361, %v359
    %v363 = vand.u32 %v281, 65535
    %v364 = vshrl.u32 %v281, 16
    %v365 = vcvt.s32.f32 %v363
    %v366 = vcvt.s32.f32 %v364
    %367 = vadd.xlane.f32.xlu0 %v365
    %v368 = vpop.xlane.xlu0 %367
    %369 = vadd.xlane.f32.xlu0 %v366
    %v370 = vpop.xlane.xlu0 %369
    %v371 = vcvt.f32.s32 %v368
    %v372 = vcvt.f32.s32 %v370
    %v373 = vshll.u32 %v372, 16
    %v374 = vadd.s32 %v373, %v371
    %v375 = vand.u32 %v282, 65535
    %v376 = vshrl.u32 %v282, 16
    %v377 = vcvt.s32.f32 %v375
    %v378 = vcvt.s32.f32 %v376
    %379 = vadd.xlane.f32.xlu0 %v377
    %v380 = vpop.xlane.xlu0 %379
    %381 = vadd.xlane.f32.xlu0 %v378
    %v382 = vpop.xlane.xlu0 %381
    %v383 = vcvt.f32.s32 %v380
    %v384 = vcvt.f32.s32 %v382
    %v385 = vshll.u32 %v384, 16
    %v386 = vadd.s32 %v385, %v383
    %v387 = vand.u32 %v283, 65535
    %v388 = vshrl.u32 %v283, 16
    %v389 = vcvt.s32.f32 %v387
    %v390 = vcvt.s32.f32 %v388
    %391 = vadd.xlane.f32.xlu0 %v389
    %v392 = vpop.xlane.xlu0 %391
    %393 = vadd.xlane.f32.xlu0 %v390
    %v394 = vpop.xlane.xlu0 %393
    %v395 = vcvt.f32.s32 %v392
    %v396 = vcvt.f32.s32 %v394
    %v397 = vshll.u32 %v396, 16
    %v398 = vadd.s32 %v397, %v395
    %v399 = vand.u32 %v284, 65535
    %v400 = vshrl.u32 %v284, 16
    %v401 = vcvt.s32.f32 %v399
    %v402 = vcvt.s32.f32 %v400
    %403 = vadd.xlane.f32.xlu0 %v401
    %v404 = vpop.xlane.xlu0 %403
    %405 = vadd.xlane.f32.xlu0 %v402
    %v406 = vpop.xlane.xlu0 %405
    %v407 = vcvt.f32.s32 %v404
    %v408 = vcvt.f32.s32 %v406
    %v409 = vshll.u32 %v408, 16
    %v410 = vadd.s32 %v409, %v407
    %v411 = vand.u32 %v285, 65535
    %v412 = vshrl.u32 %v285, 16
    %v413 = vcvt.s32.f32 %v411
    %v414 = vcvt.s32.f32 %v412
    %415 = vadd.xlane.f32.xlu0 %v413
    %v416 = vpop.xlane.xlu0 %415
    %417 = vadd.xlane.f32.xlu0 %v414
    %v418 = vpop.xlane.xlu0 %417
    %v419 = vcvt.f32.s32 %v416
    %v420 = vcvt.f32.s32 %v418
    %v421 = vshll.u32 %v420, 16
    %v422 = vadd.s32 %v421, %v419
    %v423 = vand.u32 %v286, 65535
    %v424 = vshrl.u32 %v286, 16
    %v425 = vcvt.s32.f32 %v423
    %v426 = vcvt.s32.f32 %v424
    %427 = vadd.xlane.f32.xlu0 %v425
    %v428 = vpop.xlane.xlu0 %427
    %429 = vadd.xlane.f32.xlu0 %v426
    %v430 = vpop.xlane.xlu0 %429
    %v431 = vcvt.f32.s32 %v428
    %v432 = vcvt.f32.s32 %v430
    %v433 = vshll.u32 %v432, 16
    %v434 = vadd.s32 %v433, %v431
    %v435 = vand.u32 %v287, 65535
    %v436 = vshrl.u32 %v287, 16
    %v437 = vcvt.s32.f32 %v435
    %v438 = vcvt.s32.f32 %v436
    %439 = vadd.xlane.f32.xlu0 %v437
    %v440 = vpop.xlane.xlu0 %439
    %441 = vadd.xlane.f32.xlu0 %v438
    %v442 = vpop.xlane.xlu0 %441
    %v443 = vcvt.f32.s32 %v440
    %v444 = vcvt.f32.s32 %v442
    %v445 = vshll.u32 %v444, 16
    %v446 = vadd.s32 %v445, %v443
    %v447 = vand.u32 %v288, 65535
    %v448 = vshrl.u32 %v288, 16
    %v449 = vcvt.s32.f32 %v447
    %v450 = vcvt.s32.f32 %v448
    %451 = vadd.xlane.f32.xlu0 %v449
    %v452 = vpop.xlane.xlu0 %451
    %453 = vadd.xlane.f32.xlu0 %v450
    %v454 = vpop.xlane.xlu0 %453
    %v455 = vcvt.f32.s32 %v452
    %v456 = vcvt.f32.s32 %v454
    %v457 = vshll.u32 %v456, 16
    %v458 = vadd.s32 %v457, %v455
    %v459 = vand.u32 %v289, 65535
    %v460 = vshrl.u32 %v289, 16
    %v461 = vcvt.s32.f32 %v459
    %v462 = vcvt.s32.f32 %v460
    %463 = vadd.xlane.f32.xlu0 %v461
    %v464 = vpop.xlane.xlu0 %463
    %465 = vadd.xlane.f32.xlu0 %v462
    %v466 = vpop.xlane.xlu0 %465
    %v467 = vcvt.f32.s32 %v464
    %v468 = vcvt.f32.s32 %v466
    %v469 = vshll.u32 %v468, 16
    %v470 = vadd.s32 %v469, %v467
    %v471 = vand.u32 %v290, 65535
    %v472 = vshrl.u32 %v290, 16
    %v473 = vcvt.s32.f32 %v471
    %v474 = vcvt.s32.f32 %v472
    %475 = vadd.xlane.f32.xlu0 %v473
    %v476 = vpop.xlane.xlu0 %475
    %477 = vadd.xlane.f32.xlu0 %v474
    %v478 = vpop.xlane.xlu0 %477
    %v479 = vcvt.f32.s32 %v476
    %v480 = vcvt.f32.s32 %v478
    %v481 = vshll.u32 %v480, 16
    %v482 = vadd.s32 %v481, %v479
    %vm483 = vcmp.eq.s32.totalorder %v253, %v302
    %vm484 = vcmp.eq.s32.totalorder %v253, %v314
    %vm485 = vcmp.eq.s32.totalorder %v253, %v326
    %vm486 = vcmp.eq.s32.totalorder %v253, %v338
    %vm487 = vcmp.eq.s32.totalorder %v253, %v350
    %vm488 = vcmp.eq.s32.totalorder %v253, %v362
    %vm489 = vcmp.eq.s32.totalorder %v253, %v374
    %vm490 = vcmp.eq.s32.totalorder %v253, %v386
    %vm491 = vcmp.eq.s32.totalorder %v253, %v398
    %vm492 = vcmp.eq.s32.totalorder %v253, %v410
    %vm493 = vcmp.eq.s32.totalorder %v253, %v422
    %vm494 = vcmp.eq.s32.totalorder %v253, %v434
    %vm495 = vcmp.eq.s32.totalorder %v253, %v446
    %vm496 = vcmp.eq.s32.totalorder %v253, %v458
    %vm497 = vcmp.eq.s32.totalorder %v253, %v470
    %vm498 = vcmp.eq.s32.totalorder %v253, %v482
    %v499 = vsel %vm483, %v26, 0.0
    %v500 = vsel %vm484, %v27, 0.0
    %v501 = vsel %vm485, %v28, 0.0
    %v502 = vsel %vm486, %v29, 0.0
    %v503 = vsel %vm487, %v30, 0.0
    %v504 = vsel %vm488, %v31, 0.0
    %v505 = vsel %vm489, %v32, 0.0
    %v506 = vsel %vm490, %v33, 0.0
    %v507 = vsel %vm491, %v34, 0.0
    %v508 = vsel %vm492, %v35, 0.0
    %v509 = vsel %vm493, %v36, 0.0
    %v510 = vsel %vm494, %v37, 0.0
    %v511 = vsel %vm495, %v38, 0.0
    %v512 = vsel %vm496, %v39, 0.0
    %v513 = vsel %vm497, %v40, 0.0
    %v514 = vsel %vm498, %v41, 0.0
    %v515 = vsel %vm42, %v499, 0.0
    %516 = vadd.xlane.f32.xlu0 %v515
    %v517 = vpop.xlane.xlu0 %516
    %v518 = vsel %vm42, %v500, 0.0
    %519 = vadd.xlane.f32.xlu0 %v518
    %v520 = vpop.xlane.xlu0 %519
    %v521 = vsel %vm42, %v501, 0.0
    %522 = vadd.xlane.f32.xlu0 %v521
    %v523 = vpop.xlane.xlu0 %522
    %v524 = vsel %vm42, %v502, 0.0
    %525 = vadd.xlane.f32.xlu0 %v524
    %v526 = vpop.xlane.xlu0 %525
    %v527 = vsel %vm42, %v503, 0.0
    %528 = vadd.xlane.f32.xlu0 %v527
    %v529 = vpop.xlane.xlu0 %528
    %v530 = vsel %vm42, %v504, 0.0
    %531 = vadd.xlane.f32.xlu0 %v530
    %v532 = vpop.xlane.xlu0 %531
    %v533 = vsel %vm42, %v505, 0.0
    %534 = vadd.xlane.f32.xlu0 %v533
    %v535 = vpop.xlane.xlu0 %534
    %v536 = vsel %vm42, %v506, 0.0
    %537 = vadd.xlane.f32.xlu0 %v536
    %v538 = vpop.xlane.xlu0 %537
    %v539 = vsel %vm42, %v507, 0.0
    %540 = vadd.xlane.f32.xlu0 %v539
    %v541 = vpop.xlane.xlu0 %540
    %v542 = vsel %vm42, %v508, 0.0
    %543 = vadd.xlane.f32.xlu0 %v542
    %v544 = vpop.xlane.xlu0 %543
    %v545 = vsel %vm42, %v509, 0.0
    %546 = vadd.xlane.f32.xlu0 %v545
    %v547 = vpop.xlane.xlu0 %546
    %v548 = vsel %vm42, %v510, 0.0
    %549 = vadd.xlane.f32.xlu0 %v548
    %v550 = vpop.xlane.xlu0 %549
    %v551 = vsel %vm42, %v511, 0.0
    %552 = vadd.xlane.f32.xlu0 %v551
    %v553 = vpop.xlane.xlu0 %552
    %v554 = vsel %vm42, %v512, 0.0
    %555 = vadd.xlane.f32.xlu0 %v554
    %v556 = vpop.xlane.xlu0 %555
    %v557 = vsel %vm42, %v513, 0.0
    %558 = vadd.xlane.f32.xlu0 %v557
    %v559 = vpop.xlane.xlu0 %558
    %v560 = vsel %vm42, %v514, 0.0
    %561 = vadd.xlane.f32.xlu0 %v560
    %v562 = vpop.xlane.xlu0 %561
    %vm563 = vcmp.ge.s32.totalorder %v302, 0
    %vm564 = vcmp.ge.s32.totalorder %v314, 0
    %vm565 = vcmp.ge.s32.totalorder %v326, 0
    %vm566 = vcmp.ge.s32.totalorder %v338, 0
    %vm567 = vcmp.ge.s32.totalorder %v350, 0
    %vm568 = vcmp.ge.s32.totalorder %v362, 0
    %vm569 = vcmp.ge.s32.totalorder %v374, 0
    %vm570 = vcmp.ge.s32.totalorder %v386, 0
    %vm571 = vcmp.ge.s32.totalorder %v398, 0
    %vm572 = vcmp.ge.s32.totalorder %v410, 0
    %vm573 = vcmp.ge.s32.totalorder %v422, 0
    %vm574 = vcmp.ge.s32.totalorder %v434, 0
    %vm575 = vcmp.ge.s32.totalorder %v446, 0
    %vm576 = vcmp.ge.s32.totalorder %v458, 0
    %vm577 = vcmp.ge.s32.totalorder %v470, 0
    %vm578 = vcmp.ge.s32.totalorder %v482, 0
    %vm579 = vcmp.lt.s32.totalorder %v302, 32
    %vm580 = vcmp.lt.s32.totalorder %v314, 32
    %vm581 = vcmp.lt.s32.totalorder %v326, 32
    %vm582 = vcmp.lt.s32.totalorder %v338, 32
    %vm583 = vcmp.lt.s32.totalorder %v350, 32
    %vm584 = vcmp.lt.s32.totalorder %v362, 32
    %vm585 = vcmp.lt.s32.totalorder %v374, 32
    %vm586 = vcmp.lt.s32.totalorder %v386, 32
    %vm587 = vcmp.lt.s32.totalorder %v398, 32
    %vm588 = vcmp.lt.s32.totalorder %v410, 32
    %vm589 = vcmp.lt.s32.totalorder %v422, 32
    %vm590 = vcmp.lt.s32.totalorder %v434, 32
    %vm591 = vcmp.lt.s32.totalorder %v446, 32
    %vm592 = vcmp.lt.s32.totalorder %v458, 32
    %vm593 = vcmp.lt.s32.totalorder %v470, 32
    %vm594 = vcmp.lt.s32.totalorder %v482, 32
    %vm595 = vmand %vm563, %vm579
    %vm596 = vmand %vm564, %vm580
    %vm597 = vmand %vm565, %vm581
    %vm598 = vmand %vm566, %vm582
    %vm599 = vmand %vm567, %vm583
    %vm600 = vmand %vm568, %vm584
    %vm601 = vmand %vm569, %vm585
    %vm602 = vmand %vm570, %vm586
    %vm603 = vmand %vm571, %vm587
    %vm604 = vmand %vm572, %vm588
    %vm605 = vmand %vm573, %vm589
    %vm606 = vmand %vm574, %vm590
    %vm607 = vmand %vm575, %vm591
    %vm608 = vmand %vm576, %vm592
    %vm609 = vmand %vm577, %vm593
    %vm610 = vmand %vm578, %vm594
    %v611 = vsub.f32 %v219, %v517
    %v612 = vsub.f32 %v220, %v520
    %v613 = vsub.f32 %v221, %v523
    %v614 = vsub.f32 %v222, %v526
    %v615 = vsub.f32 %v223, %v529
    %v616 = vsub.f32 %v224, %v532
    %v617 = vsub.f32 %v225, %v535
    %v618 = vsub.f32 %v226, %v538
    %v619 = vsub.f32 %v227, %v541
    %v620 = vsub.f32 %v228, %v544
    %v621 = vsub.f32 %v229, %v547
    %v622 = vsub.f32 %v230, %v550
    %v623 = vsub.f32 %v231, %v553
    %v624 = vsub.f32 %v232, %v556
    %v625 = vsub.f32 %v233, %v559
    %v626 = vsub.f32 %v234, %v562
    %v627 = vsel %vm595, %v611, 0.0
    %v628 = vsel %vm596, %v612, 0.0
    %v629 = vsel %vm597, %v613, 0.0
    %v630 = vsel %vm598, %v614, 0.0
    %v631 = vsel %vm599, %v615, 0.0
    %v632 = vsel %vm600, %v616, 0.0
    %v633 = vsel %vm601, %v617, 0.0
    %v634 = vsel %vm602, %v618, 0.0
    %v635 = vsel %vm603, %v619, 0.0
    %v636 = vsel %vm604, %v620, 0.0
    %v637 = vsel %vm605, %v621, 0.0
    %v638 = vsel %vm606, %v622, 0.0
    %v639 = vsel %vm607, %v623, 0.0
    %v640 = vsel %vm608, %v624, 0.0
    %v641 = vsel %vm609, %v625, 0.0
    %v642 = vsel %vm610, %v626, 0.0
    %v643 = vsel %vm254, %v627, 0.0
    %v644 = vsel %vm255, %v628, 0.0
    %v645 = vsel %vm256, %v629, 0.0
    %v646 = vsel %vm257, %v630, 0.0
    %v647 = vsel %vm258, %v631, 0.0
    %v648 = vsel %vm259, %v632, 0.0
    %v649 = vsel %vm260, %v633, 0.0
    %v650 = vsel %vm261, %v634, 0.0
    %v651 = vsel %vm262, %v635, 0.0
    %v652 = vsel %vm263, %v636, 0.0
    %v653 = vsel %vm264, %v637, 0.0
    %v654 = vsel %vm265, %v638, 0.0
    %v655 = vsel %vm266, %v639, 0.0
    %v656 = vsel %vm267, %v640, 0.0
    %v657 = vsel %vm268, %v641, 0.0
    %v658 = vsel %vm269, %v642, 0.0
    %v659 = vadd.f32 %v643, %v644
    %v660 = vadd.f32 %v659, %v645
    %v661 = vadd.f32 %v660, %v646
    %v662 = vadd.f32 %v661, %v647
    %v663 = vadd.f32 %v662, %v648
    %v664 = vadd.f32 %v663, %v649
    %v665 = vadd.f32 %v664, %v650
    %v666 = vadd.f32 %v665, %v651
    %v667 = vadd.f32 %v666, %v652
    %v668 = vadd.f32 %v667, %v653
    %v669 = vadd.f32 %v668, %v654
    %v670 = vadd.f32 %v669, %v655
    %v671 = vadd.f32 %v670, %v656
    %v672 = vadd.f32 %v671, %v657
    %v673 = vadd.f32 %v672, %v658
    %v674 = vrot.slane %v673, 4
    %v675 = vadd.f32 %v673, %v674
    %v676 = vrot.slane %v675, 2
    %v677 = vadd.f32 %v675, %v676
    %v678 = vrot.slane %v677, 1
    %v679 = vadd.f32 %v677, %v678
    %680 = vst [vmem:[#allocation5] sm:$0x1] %v679
    // Predicated region
    $region14: #{tpu_custom_call.1} parent=1 // pred_check
      _
    $region15: #{tpu_custom_call.1} parent=1 // pred_check_branch
      %682 = sbr.rel (0) target = $region17
    $region16: #{tpu_custom_call.1} parent=1 // pred_region
      %s684 = ssub.s32 16, 16
      %685 = vsyncadd [#allocation4], %s684
      %s687 = sshll.u32 [#allocation5], 4
      %s688 = int_to_ptr.vmem [resolvable:$true] %s687
      %690 = dma.vmem_to_hbm [thread:$0]  %s688, 16, %s2, [#allocation4]
    $region17: #{tpu_custom_call.1} parent=1 // pred_fallthru
      _
    // Predicated region
    $region18: #{tpu_custom_call.1} parent=1 // pred_check
      _
    $region19: #{tpu_custom_call.1} parent=1 // pred_check_branch
      %692 = sbr.rel (0) target = $region21
    $region20: #{tpu_custom_call.1} parent=1 // pred_region
      %693 = dma.done [#allocation4], 16
    $region21: #{tpu_custom_call.1} parent=1 // pred_fallthru
      _
    %694 = vsyncpa [#allocation3], 1
    %695 = vsyncpa [#allocation4], 1

</llo_original>
